<compile_context>
chip_gen: v5e
topology: v5e:2x2
jax: 0.10.0
libtpu: 0.0.40
codegen_flags: <defaults>
</compile_context>

<pallas_src>
import functools

import jax
import jax.numpy as jnp
from jax.experimental import pallas as pl
from jax.experimental.pallas import tpu as pltpu

LANE = 128
_VMEM_LIMIT = 32 * 1024 * 1024          # safe on v5e/v6e (128 MiB) and v7x (64 MiB)
_FUSED_BLOCK_BYTES = 6 * 1024 * 1024    # per-batch (C, HW) budget for the fused path


def _round_up(x, m):
    return ((x + m - 1) // m) * m


# --------------------------------------------------------------------------- #
# Fused single-pass kernel: pool + excite + scale for one batch element.
# --------------------------------------------------------------------------- #
def _se_fused_kernel(x_ref, w1t_ref, w2t_ref, o_ref, *, inv_hw):
    """x_ref: (1, C, HW_pad); w1t: (C, Cr_pad); w2t: (Cr_pad, C); o_ref like x."""
    # Zero padding past the true HW does not perturb the sum.
    mean = jnp.sum(x_ref[...].astype(jnp.float32), axis=-1) * inv_hw          # (1, C)
    h = jnp.dot(mean, w1t_ref[...], preferred_element_type=jnp.float32)
    h = jnp.maximum(h, 0.0)                                                    # (1, Cr_pad)
    s = jnp.dot(h, w2t_ref[...], preferred_element_type=jnp.float32)
    s = jax.nn.sigmoid(s)                                                      # (1, C)
    o_ref[...] = x_ref[...] * s[:, :, None].astype(o_ref.dtype)


# --------------------------------------------------------------------------- #
# Two-pass fallback kernels (very large spatial extents).
# --------------------------------------------------------------------------- #
def _pool_excite_kernel(x_ref, w1t_ref, w2t_ref, gate_ref, acc_ref, *, inv_hw):
    """Pass 1: tiled spatial sum + once-per-batch excitation epilogue."""
    j = pl.program_id(1)

    @pl.when(j == 0)
    def _():
        acc_ref[...] = jnp.zeros_like(acc_ref)

    acc_ref[...] += jnp.sum(x_ref[...].astype(jnp.float32), axis=-1)           # (1, C)

    @pl.when(j == pl.num_programs(1) - 1)
    def _():
        mean = acc_ref[...] * inv_hw                                           # (1, C)
        h = jnp.dot(mean, w1t_ref[...], preferred_element_type=jnp.float32)
        h = jnp.maximum(h, 0.0)
        s = jnp.dot(h, w2t_ref[...], preferred_element_type=jnp.float32)
        s = jax.nn.sigmoid(s)                                                  # (1, C)
        gate_ref[...] = s[:, :, None]                                          # (1, C, 1)


def _scale_kernel(x_ref, gate_ref, o_ref):
    """Pass 2: streaming channel-wise scale (one vmul per element)."""
    o_ref[...] = x_ref[...] * gate_ref[...].astype(o_ref.dtype)


# --------------------------------------------------------------------------- #
# Wrapper
# --------------------------------------------------------------------------- #
def se_module(x, w1, w2, *, tile_target_bytes=2 * 1024 * 1024,
              force_two_pass=False, interpret=False):
    """Squeeze-and-Excitation forward.

    x:  (B, C, H, W)
    w1: (C // r, C)   PyTorch nn.Linear weight (out, in), bias-free
    w2: (C, C // r)
    """
    B, C, H, W = x.shape
    HW = H * W
    Cr = w1.shape[0]
    itemsize = jnp.dtype(x.dtype).itemsize

    # Zero-pad the hidden dim to a lane multiple (exact: padded hidden units are
    # 0 after ReLU and contribute nothing to the second matmul).
    Cr_pad = _round_up(max(Cr, 1), LANE)
    w1t = jnp.zeros((C, Cr_pad), jnp.float32).at[:, :Cr].set(
        jnp.transpose(w1).astype(jnp.float32))
    w2t = jnp.zeros((Cr_pad, C), jnp.float32).at[:Cr, :].set(
        jnp.transpose(w2).astype(jnp.float32))

    hw_pad_full = _round_up(HW, LANE)
    fused_block_bytes = C * hw_pad_full * itemsize

    # ----------------------- fused single-pass path ------------------------ #
    if fused_block_bytes <= _FUSED_BLOCK_BYTES and not force_two_pass:
        x_flat = x.reshape(B, C, HW)
        if hw_pad_full != HW:
            x_flat = jnp.pad(x_flat, ((0, 0), (0, 0), (0, hw_pad_full - HW)))

        out_flat = pl.pallas_call(
            functools.partial(_se_fused_kernel, inv_hw=1.0 / float(HW)),
            out_shape=jax.ShapeDtypeStruct((B, C, hw_pad_full), x.dtype),
            grid=(B,),
            in_specs=[
                pl.BlockSpec((1, C, hw_pad_full), lambda i: (i, 0, 0)),
                pl.BlockSpec((C, Cr_pad), lambda i: (0, 0)),
                pl.BlockSpec((Cr_pad, C), lambda i: (0, 0)),
            ],
            out_specs=pl.BlockSpec((1, C, hw_pad_full), lambda i: (i, 0, 0)),
            compiler_params=pltpu.CompilerParams(
                dimension_semantics=("parallel",),
                vmem_limit_bytes=_VMEM_LIMIT,
            ),
            interpret=interpret,
        )(x_flat, w1t, w2t)

        if hw_pad_full != HW:
            out_flat = out_flat[:, :, :HW]
        return out_flat.reshape(B, C, H, W)

    # --------------------- two-pass streaming fallback --------------------- #
    # Spatial tile: lane-dense (multiple of 128), ~tile_target_bytes per block.
    max_tile = max(LANE, (tile_target_bytes // max(1, C * itemsize)) // LANE * LANE)
    hw_tile = min(max_tile, hw_pad_full)
    hw_pad = _round_up(HW, hw_tile)
    n_hw = hw_pad // hw_tile

    x_flat = x.reshape(B, C, HW)
    if hw_pad != HW:
        x_flat = jnp.pad(x_flat, ((0, 0), (0, 0), (0, hw_pad - HW)))

    # Pass 1: pooled mean + excitation -> gate of shape (B, C, 1).
    gate = pl.pallas_call(
        functools.partial(_pool_excite_kernel, inv_hw=1.0 / float(HW)),
        out_shape=jax.ShapeDtypeStruct((B, C, 1), jnp.float32),
        grid=(B, n_hw),
        in_specs=[
            pl.BlockSpec((1, C, hw_tile), lambda i, j: (i, 0, j)),
            pl.BlockSpec((C, Cr_pad), lambda i, j: (0, 0)),
            pl.BlockSpec((Cr_pad, C), lambda i, j: (0, 0)),
        ],
        out_specs=pl.BlockSpec((1, C, 1), lambda i, j: (i, 0, 0)),
        scratch_shapes=[pltpu.VMEM((1, C), jnp.float32)],
        compiler_params=pltpu.CompilerParams(
            dimension_semantics=("parallel", "arbitrary"),
            vmem_limit_bytes=_VMEM_LIMIT,
        ),
        interpret=interpret,
    )(x_flat, w1t, w2t)

    # Pass 2: streaming channel-wise scale.
    out_flat = pl.pallas_call(
        _scale_kernel,
        out_shape=jax.ShapeDtypeStruct((B, C, hw_pad), x.dtype),
        grid=(B, n_hw),
        in_specs=[
            pl.BlockSpec((1, C, hw_tile), lambda i, j: (i, 0, j)),
            pl.BlockSpec((1, C, 1), lambda i, j: (i, 0, 0)),
        ],
        out_specs=pl.BlockSpec((1, C, hw_tile), lambda i, j: (i, 0, j)),
        compiler_params=pltpu.CompilerParams(
            dimension_semantics=("parallel", "parallel"),
            vmem_limit_bytes=_VMEM_LIMIT,
        ),
        interpret=interpret,
    )(x_flat, gate)

    if hw_pad != HW:
        out_flat = out_flat[:, :, :HW]
    return out_flat.reshape(B, C, H, W)


if __name__ == "__main__":
    # Small shapes consistent with the module (channels >= reduction).
    B, C, H, W = 2, 64, 16, 16
    reduction = 16
    Cr = C // reduction  # 4

    key = jax.random.PRNGKey(0)
    kx, k1, k2 = jax.random.split(key, 3)

    x = jax.random.normal(kx, (B, C, H, W), dtype=jnp.float32)
    # PyTorch nn.Linear layout: (out_features, in_features), bias-free.
    w1 = jax.random.normal(k1, (Cr, C), dtype=jnp.float32) * 0.1
    w2 = jax.random.normal(k2, (C, Cr), dtype=jnp.float32) * 0.1

    # Reference (same math as the PyTorch forward).
    y_ref = jnp.mean(x, axis=(2, 3))                       # (B, C)
    y_ref = jnp.maximum(y_ref @ w1.T, 0.0)                 # (B, Cr)
    y_ref = jax.nn.sigmoid(y_ref @ w2.T)                   # (B, C)
    ref = x * y_ref[:, :, None, None]

    # Fused single-pass path (default for these shapes).
    out_fused = jax.jit(se_module)(x, w1, w2)
    jax.block_until_ready(out_fused)
    assert jnp.allclose(out_fused, ref, atol=1e-5, rtol=1e-5), "fused path mismatch"

    # Two-pass streaming fallback path.
    out_two = jax.jit(functools.partial(se_module, force_two_pass=True))(x, w1, w2)
    jax.block_until_ready(out_two)
    assert jnp.allclose(out_two, ref, atol=1e-5, rtol=1e-5), "two-pass path mismatch"

    print("KERNEL_OK")
</pallas_src>

<mosaic_0001>
module attributes {stable_mosaic.version = 11 : i64} {
  func.func @_se_fused_kernel(%arg0: i32, %arg1: memref<1x64x256xf32, #tpu.memory_space<vmem>>, %arg2: memref<64x128xf32, #tpu.memory_space<vmem>>, %arg3: memref<128x64xf32, #tpu.memory_space<vmem>>, %arg4: memref<1x64x256xf32, #tpu.memory_space<vmem>>) attributes {dimension_semantics = [#tpu.dimension_semantics<parallel>], iteration_bounds = array<i64: 2>, scalar_prefetch = 0 : i64, scratch_operands = 0 : i64, tpu.core_type = #tpu.core_type<tc>, window_params = [{transform_indices = @transform_0, window_bounds = array<i64: 1, 64, 256>}, {pipeline_mode = #tpu.pipeline_mode<synchronous>, transform_indices = @transform_1, window_bounds = array<i64: 64, 128>}, {pipeline_mode = #tpu.pipeline_mode<synchronous>, transform_indices = @transform_2, window_bounds = array<i64: 128, 64>}, {transform_indices = @transform_3, window_bounds = array<i64: 1, 64, 256>}]} {
    %c0 = arith.constant 0 : index
    %c0_0 = arith.constant 0 : index
    %c0_1 = arith.constant 0 : index
    %0 = vector.load %arg1[%c0, %c0_0, %c0_1] : memref<1x64x256xf32, #tpu.memory_space<vmem>>, vector<1x64x256xf32>
    %cst = arith.constant dense<0.000000e+00> : vector<1x64xf32>
    %1 = vector.multi_reduction <add>, %0, %cst [2] : vector<1x64x256xf32> to vector<1x64xf32>
    %cst_2 = arith.constant 3.906250e-03 : f32
    %2 = vector.broadcast %cst_2 : f32 to vector<1x64xf32>
    %3 = arith.mulf %1, %2 : vector<1x64xf32>
    %c0_3 = arith.constant 0 : index
    %c0_4 = arith.constant 0 : index
    %4 = vector.load %arg2[%c0_3, %c0_4] : memref<64x128xf32, #tpu.memory_space<vmem>>, vector<64x128xf32>
    %cst_5 = arith.constant dense<0.000000e+00> : vector<1x128xf32>
    %5 = tpu.matmul %3, %4, %cst_5 {dimension_numbers = #tpu.dot_dimension_numbers<[1], [0], [0], [1], [0, 0, 1, 1], [], []>} : vector<1x64xf32>, vector<64x128xf32>, vector<1x128xf32> -> vector<1x128xf32>
    %cst_6 = arith.constant 0.000000e+00 : f32
    %6 = vector.broadcast %cst_6 : f32 to vector<1x128xf32>
    %7 = arith.maximumf %5, %6 : vector<1x128xf32>
    %c0_7 = arith.constant 0 : index
    %c0_8 = arith.constant 0 : index
    %8 = vector.load %arg3[%c0_7, %c0_8] : memref<128x64xf32, #tpu.memory_space<vmem>>, vector<128x64xf32>
    %cst_9 = arith.constant dense<0.000000e+00> : vector<1x64xf32>
    %9 = tpu.matmul %7, %8, %cst_9 {dimension_numbers = #tpu.dot_dimension_numbers<[1], [0], [0], [1], [0, 0, 1, 1], [], []>} : vector<1x128xf32>, vector<128x64xf32>, vector<1x64xf32> -> vector<1x64xf32>
    %10 = arith.negf %9 : vector<1x64xf32>
    %11 = math.exp %10 : vector<1x64xf32>
    %cst_10 = arith.constant 1.000000e+00 : f32
    %12 = vector.broadcast %cst_10 : f32 to vector<1x64xf32>
    %13 = arith.addf %12, %11 : vector<1x64xf32>
    %14 = arith.divf %12, %13 : vector<1x64xf32>
    %c0_11 = arith.constant 0 : index
    %c0_12 = arith.constant 0 : index
    %c0_13 = arith.constant 0 : index
    %15 = vector.load %arg1[%c0_11, %c0_12, %c0_13] : memref<1x64x256xf32, #tpu.memory_space<vmem>>, vector<1x64x256xf32>
    %16 = vector.shape_cast %14 : vector<1x64xf32> to vector<1x64x1xf32>
    %17 = vector.broadcast %16 : vector<1x64x1xf32> to vector<1x64x256xf32>
    %18 = arith.mulf %15, %17 : vector<1x64x256xf32>
    %c0_14 = arith.constant 0 : index
    %c0_15 = arith.constant 0 : index
    %c0_16 = arith.constant 0 : index
    %19 = vector.load %arg4[%c0_14, %c0_15, %c0_16] : memref<1x64x256xf32, #tpu.memory_space<vmem>>, vector<1x64x256xf32>
    tpu.vector_store %arg4[%c0_14, %c0_15, %c0_16], %18 {strides = array<i32>} : memref<1x64x256xf32, #tpu.memory_space<vmem>>, vector<1x64x256xf32>,
    return
  }
  func.func @transform_0(%arg0: i32) -> (i32, i32, i32) {
    %c0_i32 = arith.constant 0 : i32
    %c0_i32_0 = arith.constant 0 : i32
    %c0_i32_1 = arith.constant 0 : i32
    return %arg0, %c0_i32, %c0_i32_0 : i32, i32, i32
  }
  func.func @transform_1(%arg0: i32) -> (i32, i32) {
    %c0_i32 = arith.constant 0 : i32
    %c0_i32_0 = arith.constant 0 : i32
    %c0_i32_1 = arith.constant 0 : i32
    return %c0_i32, %c0_i32_0 : i32, i32
  }
  func.func @transform_2(%arg0: i32) -> (i32, i32) {
    %c0_i32 = arith.constant 0 : i32
    %c0_i32_0 = arith.constant 0 : i32
    %c0_i32_1 = arith.constant 0 : i32
    return %c0_i32, %c0_i32_0 : i32, i32
  }
  func.func @transform_3(%arg0: i32) -> (i32, i32, i32) {
    %c0_i32 = arith.constant 0 : i32
    %c0_i32_0 = arith.constant 0 : i32
    %c0_i32_1 = arith.constant 0 : i32
    return %arg0, %c0_i32, %c0_i32_0 : i32, i32, i32
  }
}

</mosaic_0001>

<llo_original>
// kernel: se_module.1
$region0: #{se_module.1}
  #allocation0 [shape = 'u32[]', space=smem, size = 0x4, offset = 0x4, fixed_abs, tag = 'smem constant byte address 0x4 - core index']
  #allocation1 [shape = 'u32[72,128]{1,0:T(1,128)}', space=vmem, size = 0x9000, scoped, tag = 'internal scratch']
  %s0 = inlined_call_operand.vmem [shape: f32[2,64,256], index: 0, kind: input, shape index: {}]
  %s1 = inlined_call_operand.vmem [shape: f32[64,128], index: 1, kind: input, shape index: {}]
  %s2 = inlined_call_operand.vmem [shape: f32[128,64], index: 2, kind: input, shape index: {}]
  %s3 = inlined_call_operand.vmem [shape: f32[2,64,256], index: 3, kind: output, shape index: {}]
  %s4 = sld [smem:[#allocation0]]
  $region45: #{se_module.1} parent=0
    _
  %s6 = ssub.s32 1, %s4
  %s7 = scalar_select 0, %s6, %s4
  loop: start=0, step=1, limit=4
  $region2: #{se_module.1} parent=0 // loop_pre_header
    _
  $region3: #{se_module.1} parent=0 // loop_header
    %s9 = sphi 0, %s13
    %p10 = scmp.ge.s32.totalorder %s9, 4
    %s19 = sphi 0, %s21
    %s22 = sphi 0, %s19
    %s23 = sphi 0, %s22
    %s39 = sphi 0, %s23
    %s43 = sphi 0, %s43
    %s45 = sphi 0, %s43
    %s46 = sphi 0, %s45
    %s60 = sphi 0, %s46
    %s64 = sphi 0, %s64
    %s66 = sphi 0, %s64
    %s67 = sphi 0, %s66
    %s81 = sphi 0, %s67
    %s87 = sphi 0, %s89
    %s90 = sphi 0, %s87
    %s91 = sphi 0, %s90
    %s107 = sphi 0, %s91
  $region4: #{se_module.1} parent=0 // loop_header_branch
    %12 = sbr.rel (%p10) target = $region8
  $region5: #{se_module.1} parent=0 // loop_body
    %s14 = ssub.s32 %s9, 1
    %s15 = ssub.s32 %s9, 2
    %s16 = sadd.s32 %s9, 1
    %s17 = ssub.s32 %s9, %s16
    %p18 = scmp.eq.s32.totalorder %s17, 0
    %s20 = sadd.s32 %s19, 1
    %s21 = scalar_select %p18, %s19, %s20
    %p24 = pneg %p18
    %p25 = scmp.eq.s32.totalorder %s9, 1
    %p26 = por %p24, %p25
    %p27 = scmp.ne.s32.totalorder %s19, %s22
    %p28 = scmp.eq.s32.totalorder %s9, 0
    %p29 = por %p27, %p28
    %p30 = scmp.ne.s32.totalorder %s19, %s22
    %p31 = scmp.eq.s32.totalorder %s14, 1
    %p32 = por %p30, %p31
    %p33 = scmp.ne.s32.totalorder %s22, %s23
    %p34 = scmp.eq.s32.totalorder %s14, 0
    %p35 = por %p33, %p34
    %p36 = scmp.ne.s32.totalorder %s22, %s23
    %p37 = scmp.eq.s32.totalorder %s15, 1
    %p38 = por %p36, %p37
    %p40 = scmp.ne.s32.totalorder %s23, %s39
    %p41 = scmp.eq.s32.totalorder %s15, 0
    %p42 = por %p40, %p41
    %s44 = sadd.s32 %s43, 1
    %p47 = scmp.eq.s32.totalorder %s9, 1
    %p48 = scmp.ne.s32.totalorder %s43, %s45
    %p49 = scmp.eq.s32.totalorder %s9, 0
    %p50 = por %p48, %p49
    %p51 = scmp.ne.s32.totalorder %s43, %s45
    %p52 = scmp.eq.s32.totalorder %s14, 1
    %p53 = por %p51, %p52
    %p54 = scmp.ne.s32.totalorder %s45, %s46
    %p55 = scmp.eq.s32.totalorder %s14, 0
    %p56 = por %p54, %p55
    %p57 = scmp.ne.s32.totalorder %s45, %s46
    %p58 = scmp.eq.s32.totalorder %s15, 1
    %p59 = por %p57, %p58
    %p61 = scmp.ne.s32.totalorder %s46, %s60
    %p62 = scmp.eq.s32.totalorder %s15, 0
    %p63 = por %p61, %p62
    %s65 = sadd.s32 %s64, 1
    %p68 = scmp.eq.s32.totalorder %s9, 1
    %p69 = scmp.ne.s32.totalorder %s64, %s66
    %p70 = scmp.eq.s32.totalorder %s9, 0
    %p71 = por %p69, %p70
    %p72 = scmp.ne.s32.totalorder %s64, %s66
    %p73 = scmp.eq.s32.totalorder %s14, 1
    %p74 = por %p72, %p73
    %p75 = scmp.ne.s32.totalorder %s66, %s67
    %p76 = scmp.eq.s32.totalorder %s14, 0
    %p77 = por %p75, %p76
    %p78 = scmp.ne.s32.totalorder %s66, %s67
    %p79 = scmp.eq.s32.totalorder %s15, 1
    %p80 = por %p78, %p79
    %p82 = scmp.ne.s32.totalorder %s67, %s81
    %p83 = scmp.eq.s32.totalorder %s15, 0
    %p84 = por %p82, %p83
    %s85 = ssub.s32 %s9, %s16
    %p86 = scmp.eq.s32.totalorder %s85, 0
    %s88 = sadd.s32 %s87, 1
    %s89 = scalar_select %p86, %s87, %s88
    %p92 = pneg %p86
    %p93 = scmp.eq.s32.totalorder %s9, 1
    %p94 = por %p92, %p93
    %p95 = scmp.ne.s32.totalorder %s87, %s90
    %p96 = scmp.eq.s32.totalorder %s9, 0
    %p97 = por %p95, %p96
    %p98 = scmp.ne.s32.totalorder %s87, %s90
    %p99 = scmp.eq.s32.totalorder %s14, 1
    %p100 = por %p98, %p99
    %p101 = scmp.ne.s32.totalorder %s90, %s91
    %p102 = scmp.eq.s32.totalorder %s14, 0
    %p103 = por %p101, %p102
    %p104 = scmp.ne.s32.totalorder %s90, %s91
    %p105 = scmp.eq.s32.totalorder %s15, 1
    %p106 = por %p104, %p105
    %p108 = scmp.ne.s32.totalorder %s91, %s107
    %p109 = scmp.eq.s32.totalorder %s15, 0
    %p110 = por %p108, %p109
    %p111 = scmp.le.s32.totalorder 1, %s9
    %p112 = scmp.lt.s32.totalorder %s9, 3
    %p113 = pnand %p111, %p112
    %p114 = pneg %p113
    // Predicated region
    $region9: #{se_module.1} parent=5 // pred_check
      _
    $region10: #{se_module.1} parent=5 // pred_check_branch
      %116 = sbr.rel (%p113) target = $region12
    $region11: #{se_module.1} parent=5 // pred_region
      %s117 = ssub.s32 %s9, 1
      // Predicated region
      $region13: #{se_module.1} parent=11 // pred_check
        %p118 = pneg %p56
      $region14: #{se_module.1} parent=11 // pred_check_branch
        %120 = sbr.rel (%p118) target = $region16
      $region15: #{se_module.1} parent=11 // pred_region
        _
      $region16: #{se_module.1} parent=11 // pred_fallthru
        _
      // Predicated region
      $region17: #{se_module.1} parent=11 // pred_check
        %p121 = pneg %p77
      $region18: #{se_module.1} parent=11 // pred_check_branch
        %123 = sbr.rel (%p121) target = $region20
      $region19: #{se_module.1} parent=11 // pred_region
        _
      $region20: #{se_module.1} parent=11 // pred_fallthru
        _
    $region12: #{se_module.1} parent=5 // pred_fallthru
      _
    %p124 = scmp.lt.s32.totalorder %s9, 2
    // Predicated region
    $region21: #{se_module.1} parent=5 // pred_check
      %p125 = pneg %p124
    $region22: #{se_module.1} parent=5 // pred_check_branch
      %127 = sbr.rel (%p125) target = $region24
    $region23: #{se_module.1} parent=5 // pred_region
      // Predicated region
      $region25: #{se_module.1} parent=23 // pred_check
        %p128 = pneg %p29
      $region26: #{se_module.1} parent=23 // pred_check_branch
        %130 = sbr.rel (%p128) target = $region28
      $region27: #{se_module.1} parent=23 // pred_region
        %p131 = scmp.lt.s32.totalorder %s9, 1
        %s132 = scalar_select %p131, %s9, 1
        %s133 = smul.addr %s132, 16
        %s134 = smul.addr %s133, 8
        %s135 = scalar_lea.vmem %s0, %s134
      $region28: #{se_module.1} parent=23 // pred_fallthru
        _
    $region24: #{se_module.1} parent=5 // pred_fallthru
      _
    %p136 = scmp.le.s32.totalorder 1, %s9
    %p137 = scmp.lt.s32.totalorder %s9, 3
    %p138 = pnand %p136, %p137
    %p139 = pneg %p138
    // Predicated region
    $region29: #{se_module.1} parent=5 // pred_check
      _
    $region30: #{se_module.1} parent=5 // pred_check_branch
      %141 = sbr.rel (%p138) target = $region32
    $region31: #{se_module.1} parent=5 // pred_region
      %s142 = ssub.s32 %s9, 1
      %p143 = scmp.lt.s32.totalorder %s14, 1
      %s144 = scalar_select %p143, %s14, 1
      %s145 = smul.addr %s144, 16
      %s146 = smul.addr %s145, 8
      %s147 = scalar_lea.vmem %s0, %s146
      %p148 = pneg %p35
      %p149 = pneg %p32
      %p150 = pneg %p56
      %p151 = pneg %p53
      %p152 = pneg %p77
      %p153 = pneg %p74
      %p154 = pneg %p103
      %p155 = pneg %p100
      %p156 = scmp.lt.s32.totalorder %s14, 1
      %s157 = scalar_select %p156, %s14, 1
      %s158 = smul.addr %s157, 16
      %s159 = smul.addr %s158, 8
      %s160 = scalar_lea.vmem %s3, %s159
      %p161 = scmp.lt.s32.totalorder %s14, 1
      %s162 = scalar_select %p161, %s14, 1
      %s163 = smul.addr %s162, 16
      %s164 = smul.addr %s163, 8
      %s165 = scalar_lea.vmem %s0, %s164
      %p166 = scmp.lt.s32.totalorder %s14, 1
      %s167 = scalar_select %p166, %s14, 1
      %s168 = smul.addr %s167, 16
      %s169 = smul.addr %s168, 8
      %s170 = scalar_lea.vmem %s3, %s169
      %v171 = vld [vmem:[%s165] sm:$0xff]
      %v172 = vld [vmem:[%s165 + $0x8] sm:$0xff]
      %v173 = vld [vmem:[%s165 + $0x10] sm:$0xff]
      %v174 = vld [vmem:[%s165 + $0x18] sm:$0xff]
      %v175 = vld [vmem:[%s165 + $0x20] sm:$0xff]
      %v176 = vld [vmem:[%s165 + $0x28] sm:$0xff]
      %v177 = vld [vmem:[%s165 + $0x30] sm:$0xff]
      %v178 = vld [vmem:[%s165 + $0x38] sm:$0xff]
      %v179 = vld [vmem:[%s165 + $0x40] sm:$0xff]
      %v180 = vld [vmem:[%s165 + $0x48] sm:$0xff]
      %v181 = vld [vmem:[%s165 + $0x50] sm:$0xff]
      %v182 = vld [vmem:[%s165 + $0x58] sm:$0xff]
      %v183 = vld [vmem:[%s165 + $0x60] sm:$0xff]
      %v184 = vld [vmem:[%s165 + $0x68] sm:$0xff]
      %v185 = vld [vmem:[%s165 + $0x70] sm:$0xff]
      %v186 = vld [vmem:[%s165 + $0x78] sm:$0xff]
      %v187 = vadd.f32 %v171, %v172
      %188 = vadd.xlane.f32.xlu0 %v187
      %v189 = vpop.xlane.xlu0 %188
      %v190 = vadd.f32 %v173, %v174
      %191 = vadd.xlane.f32.xlu0 %v190
      %v192 = vpop.xlane.xlu0 %191
      %v193 = vadd.f32 %v175, %v176
      %194 = vadd.xlane.f32.xlu0 %v193
      %v195 = vpop.xlane.xlu0 %194
      %v196 = vadd.f32 %v177, %v178
      %197 = vadd.xlane.f32.xlu0 %v196
      %v198 = vpop.xlane.xlu0 %197
      %v199 = vadd.f32 %v179, %v180
      %200 = vadd.xlane.f32.xlu0 %v199
      %v201 = vpop.xlane.xlu0 %200
      %v202 = vadd.f32 %v181, %v182
      %203 = vadd.xlane.f32.xlu0 %v202
      %v204 = vpop.xlane.xlu0 %203
      %v205 = vadd.f32 %v183, %v184
      %206 = vadd.xlane.f32.xlu0 %v205
      %v207 = vpop.xlane.xlu0 %206
      %v208 = vadd.f32 %v185, %v186
      %209 = vadd.xlane.f32.xlu0 %v208
      %v210 = vpop.xlane.xlu0 %209
      %v211 = vmul.f32 %v189, 0.00390625
      %v212 = vmul.f32 %v192, 0.00390625
      %v213 = vmul.f32 %v195, 0.00390625
      %v214 = vmul.f32 %v198, 0.00390625
      %v215 = vmul.f32 %v201, 0.00390625
      %v216 = vmul.f32 %v204, 0.00390625
      %v217 = vmul.f32 %v207, 0.00390625
      %v218 = vmul.f32 %v210, 0.00390625
      %v219 = vld [vmem:[%s1] sm:$0xff]
      %v220 = vld [vmem:[%s1 + $0x8] sm:$0xff]
      %v221 = vld [vmem:[%s1 + $0x10] sm:$0xff]
      %v222 = vld [vmem:[%s1 + $0x18] sm:$0xff]
      %v223 = vld [vmem:[%s1 + $0x20] sm:$0xff]
      %v224 = vld [vmem:[%s1 + $0x28] sm:$0xff]
      %v225 = vld [vmem:[%s1 + $0x30] sm:$0xff]
      %v226 = vld [vmem:[%s1 + $0x38] sm:$0xff]
      %v235 = vlaneseq
      %v236 = vand.u32 %v235, 127
      %v237 = vperm.slane %v211, %v236
      %v238 = vadd.s32 %v236, 4294967288
      %v239 = vperm.slane %v212, %v238
      %vm240 = vcmask 130112
      %v241 = vsel %vm240, %v239, %v237
      %v242 = vadd.s32 %v236, 4294967280
      %v243 = vperm.slane %v213, %v242
      %vm244 = vcmask 195712
      %v245 = vsel %vm244, %v243, %v241
      %v246 = vadd.s32 %v236, 4294967272
      %v247 = vperm.slane %v214, %v246
      %vm248 = vcmask 261312
      %v249 = vsel %vm248, %v247, %v245
      %v250 = vadd.s32 %v236, 4294967264
      %v251 = vperm.slane %v215, %v250
      %vm252 = vcmask 326912
      %v253 = vsel %vm252, %v251, %v249
      %v254 = vadd.s32 %v236, 4294967256
      %v255 = vperm.slane %v216, %v254
      %vm256 = vcmask 392512
      %v257 = vsel %vm256, %v255, %v253
      %v258 = vadd.s32 %v236, 4294967248
      %v259 = vperm.slane %v217, %v258
      %vm260 = vcmask 458112
      %v261 = vsel %vm260, %v259, %v257
      %v262 = vadd.s32 %v236, 4294967240
      %v263 = vperm.slane %v218, %v262
      %vm264 = vcmask 523712
      %v265 = vsel %vm264, %v263, %v261
      %vm266 = vcmask 523264
      %v267 = vsel %vm266, %v265, 0
      %269 = vmatpush.msra.mxu0 0.0
      %270 = vmatpush.msra.mxu0 0.0
      %271 = vmatpush.msra.mxu0 0.0
      %272 = vmatpush.msra.mxu0 0.0
      %273 = vmatpush.msra.mxu0 0.0
      %274 = vmatpush.msra.mxu0 0.0
      %275 = vmatpush.msra.mxu0 0.0
      %276 = vmatpush.msra.mxu0 0.0
      %277 = vmatpush.msra.mxu0 %v226
      %278 = vmatpush.msra.mxu0 %v225
      %279 = vmatpush.msra.mxu0 %v224
      %280 = vmatpush.msra.mxu0 %v223
      %281 = vmatpush.msra.mxu0 %v222
      %282 = vmatpush.msra.mxu0 %v221
      %283 = vmatpush.msra.mxu0 %v220
      %284 = vmatpush.msra.mxu0 %v219
      %285 = vmatmul.f32.gmra.mxu0 %v267
      %v286 = vpop.f32.mrf.mxu0
      %v287 = vadd.f32 0.0, %v286
      %288 = vdwg.mxu0
      %v289 = vmax.f32 %v287, 0.0
      %v290 = vld [vmem:[%s2] sm:$0xff]
      %v291 = vld [vmem:[%s2 + $0x8] sm:$0xff]
      %v292 = vld [vmem:[%s2 + $0x10] sm:$0xff]
      %v293 = vld [vmem:[%s2 + $0x18] sm:$0xff]
      %v294 = vld [vmem:[%s2 + $0x20] sm:$0xff]
      %v295 = vld [vmem:[%s2 + $0x28] sm:$0xff]
      %v296 = vld [vmem:[%s2 + $0x30] sm:$0xff]
      %v297 = vld [vmem:[%s2 + $0x38] sm:$0xff]
      %v298 = vld [vmem:[%s2 + $0x40] sm:$0xff]
      %v299 = vld [vmem:[%s2 + $0x48] sm:$0xff]
      %v300 = vld [vmem:[%s2 + $0x50] sm:$0xff]
      %v301 = vld [vmem:[%s2 + $0x58] sm:$0xff]
      %v302 = vld [vmem:[%s2 + $0x60] sm:$0xff]
      %v303 = vld [vmem:[%s2 + $0x68] sm:$0xff]
      %v304 = vld [vmem:[%s2 + $0x70] sm:$0xff]
      %v305 = vld [vmem:[%s2 + $0x78] sm:$0xff]
      %306 = vmatpush.msra.mxu0 %v305
      %307 = vmatpush.msra.mxu0 %v304
      %308 = vmatpush.msra.mxu0 %v303
      %309 = vmatpush.msra.mxu0 %v302
      %310 = vmatpush.msra.mxu0 %v301
      %311 = vmatpush.msra.mxu0 %v300
      %312 = vmatpush.msra.mxu0 %v299
      %313 = vmatpush.msra.mxu0 %v298
      %314 = vmatpush.msra.mxu0 %v297
      %315 = vmatpush.msra.mxu0 %v296
      %316 = vmatpush.msra.mxu0 %v295
      %317 = vmatpush.msra.mxu0 %v294
      %318 = vmatpush.msra.mxu0 %v293
      %319 = vmatpush.msra.mxu0 %v292
      %320 = vmatpush.msra.mxu0 %v291
      %321 = vmatpush.msra.mxu0 %v290
      %322 = vmatmul.f32.gmra.mxu0 %v289
      %v323 = vpop.f32.mrf.mxu0
      %v324 = vadd.f32 0.0, %v323
      %325 = vdwg.mxu0
      %v326 = vxor.u32 %v324, 2147483648
      %v327 = vmul.f32 %v326, 1.442695
      %v328 = vpow.pop %v327
      %v329 = vadd.f32 %v328, 1.0
      %v330 = vrcp.pop %v329
      %v331 = vmul.f32 %v329, %v330
      %v332 = vsub.f32 1.0, %v331
      %v333 = vmul.f32 %v330, %v332
      %v334 = vadd.f32 %v330, %v333
      %vm335 = vweird.f32 %v329
      %vm336 = vweird.f32 %v330
      %vm337 = vmor %vm335, %vm336
      %v338 = vsel %vm337, %v330, %v334
      %v339 = vand.u32 2147483647, %v329
      %vm340 = vcmp.eq.f32.partialorder %v339, 8.507059e+37
      %v341 = vand.u32 %v329, 2147483648
      %v342 = vor.u32 1.1754944e-38, %v341
      %v343 = vsel %vm340, %v342, %v338
      %v344 = vmul.f32 1.0, %v343
      %v345 = vperm.slane %v344, 0
      %v346 = vlaneseq
      %v347 = vshrl.u32 %v346, 7
      %349 = vset.pattern.permute.xlu0 %v347
      %350 = vperm.xlu0 %349, %v345
      %v351 = vpop.permute.xlu0 %350
      %v352 = vlaneseq
      %v353 = vshrl.u32 %v352, 7
      %v354 = vadd.s32 %v353, 8
      %355 = vset.pattern.permute.xlu0 %v354
      %356 = vperm.xlu0 %355, %v345
      %v357 = vpop.permute.xlu0 %356
      %v358 = vlaneseq
      %v359 = vshrl.u32 %v358, 7
      %v360 = vadd.s32 %v359, 16
      %361 = vset.pattern.permute.xlu0 %v360
      %362 = vperm.xlu0 %361, %v345
      %v363 = vpop.permute.xlu0 %362
      %v364 = vlaneseq
      %v365 = vshrl.u32 %v364, 7
      %v366 = vadd.s32 %v365, 24
      %367 = vset.pattern.permute.xlu0 %v366
      %368 = vperm.xlu0 %367, %v345
      %v369 = vpop.permute.xlu0 %368
      %v370 = vlaneseq
      %v371 = vshrl.u32 %v370, 7
      %v372 = vadd.s32 %v371, 32
      %373 = vset.pattern.permute.xlu0 %v372
      %374 = vperm.xlu0 %373, %v345
      %v375 = vpop.permute.xlu0 %374
      %v376 = vlaneseq
      %v377 = vshrl.u32 %v376, 7
      %v378 = vadd.s32 %v377, 40
      %379 = vset.pattern.permute.xlu0 %v378
      %380 = vperm.xlu0 %379, %v345
      %v381 = vpop.permute.xlu0 %380
      %v382 = vlaneseq
      %v383 = vshrl.u32 %v382, 7
      %v384 = vadd.s32 %v383, 48
      %385 = vset.pattern.permute.xlu0 %v384
      %386 = vperm.xlu0 %385, %v345
      %v387 = vpop.permute.xlu0 %386
      %v388 = vlaneseq
      %v389 = vshrl.u32 %v388, 7
      %v390 = vadd.s32 %v389, 56
      %391 = vset.pattern.permute.xlu0 %v390
      %392 = vperm.xlu0 %391, %v345
      %v393 = vpop.permute.xlu0 %392
      %v394 = vmul.f32 %v171, %v351
      %v395 = vmul.f32 %v172, %v351
      %v396 = vmul.f32 %v173, %v357
      %v397 = vmul.f32 %v174, %v357
      %v398 = vmul.f32 %v175, %v363
      %v399 = vmul.f32 %v176, %v363
      %v400 = vmul.f32 %v177, %v369
      %v401 = vmul.f32 %v178, %v369
      %v402 = vmul.f32 %v179, %v375
      %v403 = vmul.f32 %v180, %v375
      %v404 = vmul.f32 %v181, %v381
      %v405 = vmul.f32 %v182, %v381
      %v406 = vmul.f32 %v183, %v387
      %v407 = vmul.f32 %v184, %v387
      %v408 = vmul.f32 %v185, %v393
      %v409 = vmul.f32 %v186, %v393
      %410 = vst [vmem:[%s170] sm:$0xff] %v394
      %411 = vst [vmem:[%s170 + $0x8] sm:$0xff] %v395
      %412 = vst [vmem:[%s170 + $0x10] sm:$0xff] %v396
      %413 = vst [vmem:[%s170 + $0x18] sm:$0xff] %v397
      %414 = vst [vmem:[%s170 + $0x20] sm:$0xff] %v398
      %415 = vst [vmem:[%s170 + $0x28] sm:$0xff] %v399
      %416 = vst [vmem:[%s170 + $0x30] sm:$0xff] %v400
      %417 = vst [vmem:[%s170 + $0x38] sm:$0xff] %v401
      %418 = vst [vmem:[%s170 + $0x40] sm:$0xff] %v402
      %419 = vst [vmem:[%s170 + $0x48] sm:$0xff] %v403
      %420 = vst [vmem:[%s170 + $0x50] sm:$0xff] %v404
      %421 = vst [vmem:[%s170 + $0x58] sm:$0xff] %v405
      %422 = vst [vmem:[%s170 + $0x60] sm:$0xff] %v406
      %423 = vst [vmem:[%s170 + $0x68] sm:$0xff] %v407
      %424 = vst [vmem:[%s170 + $0x70] sm:$0xff] %v408
      %425 = vst [vmem:[%s170 + $0x78] sm:$0xff] %v409
      %p426 = scmp.lt.s32.totalorder %s14, 1
      %s427 = scalar_select %p426, %s14, 1
      %s428 = smul.addr %s427, 16
      %s429 = smul.addr %s428, 8
      %s430 = scalar_lea.vmem %s3, %s429
      // Predicated region
      $region33: #{se_module.1} parent=31 // pred_check
        %p431 = pneg %p100
      $region34: #{se_module.1} parent=31 // pred_check_branch
        %433 = sbr.rel (%p431) target = $region36
      $region35: #{se_module.1} parent=31 // pred_region
        _
      $region36: #{se_module.1} parent=31 // pred_fallthru
        _
    $region32: #{se_module.1} parent=5 // pred_fallthru
      _
    %p434 = scmp.le.s32.totalorder 2, %s9
    // Predicated region
    $region37: #{se_module.1} parent=5 // pred_check
      %p435 = pneg %p434
    $region38: #{se_module.1} parent=5 // pred_check_branch
      %437 = sbr.rel (%p435) target = $region40
    $region39: #{se_module.1} parent=5 // pred_region
      %s438 = ssub.s32 %s9, 2
      // Predicated region
      $region41: #{se_module.1} parent=39 // pred_check
        %p439 = pneg %p106
      $region42: #{se_module.1} parent=39 // pred_check_branch
        %441 = sbr.rel (%p439) target = $region44
      $region43: #{se_module.1} parent=39 // pred_region
        %p442 = scmp.lt.s32.totalorder %s15, 1
        %s443 = scalar_select %p442, %s15, 1
        %s444 = smul.addr %s443, 16
        %s445 = smul.addr %s444, 8
        %s446 = scalar_lea.vmem %s3, %s445
      $region44: #{se_module.1} parent=39 // pred_fallthru
        _
    $region40: #{se_module.1} parent=5 // pred_fallthru
      _
  $region6: #{se_module.1} parent=0 // loop_footer
    %s13 = sadd.s32 1, %s9
  $region7: #{se_module.1} parent=0 // loop_footer_branch
    %8 = sbr.rel target = $region3
  $region8: #{se_module.1} parent=0 // loop_exit
    _

</llo_original>
